<compile_context>
chip_gen: v7x
topology: tpu7x:2x2x1
jax: 0.10.0
libtpu: 0.0.40
codegen_flags: <defaults>
</compile_context>

<pallas_src>
import functools

import jax
import jax.numpy as jnp
from jax.experimental import pallas as pl
from jax.experimental.pallas import tpu as pltpu


# ----------------------------- fused kernel --------------------------------

def _experiment1_kernel(
    lidx_ref, ridx_ref, feats_ref, wf_ref,
    wc1_ref, bc1_ref, wc2_ref, bc2_ref,
    wp1_ref, bp1_ref, wp2_ref, bp2_ref,
    o_ref, *, n_edges):
  f32 = jnp.float32
  n_nodes = feats_ref.shape[0]
  two_e = lidx_ref.shape[1]                          # 2 * n_edges

  # --- fused one-hot endpoint matrices (VPU compares, no scatter) -----------
  node_iota = jax.lax.broadcasted_iota(jnp.int32, (n_nodes, two_e), 0)
  L = (node_iota == lidx_ref[...]).astype(f32)       # (N, 2E) = [su | sp]
  R = (node_iota == ridx_ref[...]).astype(f32)       # (N, 2E) = [sp | su]

  # --- symmetric adjacency in ONE MXU matmul ---------------------------------
  c_last = (((1,), (1,)), ((), ()))                  # contract trailing axis
  adj = jax.lax.dot_general(L, R, c_last,
                            preferred_element_type=f32)   # su sp^T + sp su^T

  # Self-loop folded analytically: deg = rowsum(A) + 1, (A+I)sx = A@sx + sx.
  deg = jnp.sum(adj, axis=-1, keepdims=True) + 1.0   # (N, 1)
  d_inv_sqrt = jax.lax.rsqrt(deg)                    # EUP transcendental

  # --- fused node feature transform (block-diag feats incl. bias columns) ----
  x = jnp.dot(feats_ref[...], wf_ref[...], preferred_element_type=f32)  # (N, D)

  # GCNConv: D^-1/2 (A+I) D^-1/2 (X W) + b, normalization as two row scalings.
  def gcn(x_in, w_ref, b_ref):
    xw = jnp.dot(x_in, w_ref[...], preferred_element_type=f32)
    sx = d_inv_sqrt * xw
    agg = jnp.dot(adj, sx, preferred_element_type=f32) + sx   # (A + I) sx
    return d_inv_sqrt * agg + b_ref[...]

  x = jnp.maximum(gcn(x, wc1_ref, bc1_ref), 0.0)     # conv1 + ReLU
  # F.dropout(p=0.2) is identity at inference (eval semantics).
  x = gcn(x, wc2_ref, bc2_ref)                       # conv2

  # --- fused per-edge gather: [ue; pe] in one MXU matmul ---------------------
  c_first = (((0,), (0,)), ((), ()))                 # contract node axis
  gathered = jax.lax.dot_general(L, x, c_first,
                                 preferred_element_type=f32)   # (2E, D)

  # --- fused L2 normalize over both halves, then sublane-aligned slices ------
  normed = gathered * jax.lax.rsqrt(
      jnp.maximum(jnp.sum(gathered * gathered, -1, keepdims=True), 1e-24))
  d = normed[:n_edges, :] * normed[n_edges:, :]      # (E, D) hadamard

  # --- predictor MLP; final layer contracts D and yields lane-dense (1, E) ---
  h = jnp.maximum(
      jnp.dot(d, wp1_ref[...], preferred_element_type=f32) + bp1_ref[...], 0.0)
  out = jax.lax.dot_general(wp2_ref[...], h, c_last,
                            preferred_element_type=f32)        # (1, E)
  o_ref[...] = (out + bp2_ref[0, 0]).astype(o_ref.dtype)       # scalar from SMEM


# ----------------------------- params & wrapper -----------------------------

def init_params(key, user_feature_dim, product_feature_dim, embedding_dim):
  keys = jax.random.split(key, 6)

  def lin(k, fan_in, fan_out):
    kw, kb = jax.random.split(k)
    # Stored pre-transposed as [in, out] (MXU-friendly; no .T in forward).
    w = jax.random.normal(kw, (fan_in, fan_out), jnp.float32) * 0.1
    b = jax.random.normal(kb, (1, fan_out), jnp.float32) * 0.1
    return w, b

  p2_w, p2_b = lin(keys[5], embedding_dim, 1)
  return {
      "user_lin": lin(keys[0], user_feature_dim, embedding_dim),
      "prod_lin": lin(keys[1], product_feature_dim, embedding_dim),
      "conv1": lin(keys[2], embedding_dim, embedding_dim),
      "conv2": lin(keys[3], embedding_dim, embedding_dim),
      "pred1": lin(keys[4], embedding_dim, embedding_dim),
      # Final layer kept as a (1, D) row + (1, 1) scalar bias (SMEM).
      "pred2": (p2_w.reshape(1, embedding_dim), p2_b.reshape(1, 1)),
  }


def experiment_1_forward(params, edge_index, user_features, product_features):
  nu = user_features.shape[0]
  npr = product_features.shape[0]
  n_nodes = nu + npr
  n_edges = edge_index.shape[1]
  fu = user_features.shape[1]
  fp = product_features.shape[1]
  emb = params["conv1"][0].shape[1]

  # Fused edge-endpoint index rows (lane-major), (1, 2E) each.
  ei = edge_index.astype(jnp.int32)
  lidx = jnp.concatenate([ei[0], ei[1]]).reshape(1, 2 * n_edges)
  ridx = jnp.concatenate([ei[1], ei[0]]).reshape(1, 2 * n_edges)

  # Block-diagonal feature matrix [[uf,0],[0,pf]] with two indicator columns
  # folding the per-partition biases (layout plumbing only: lets the kernel do
  # ONE transform matmul instead of two matmuls + a sublane concat).
  feats = jnp.zeros((n_nodes, fu + fp + 2), jnp.float32)
  feats = feats.at[:nu, :fu].set(user_features)
  feats = feats.at[nu:, fu:fu + fp].set(product_features)
  feats = feats.at[:nu, fu + fp].set(1.0)
  feats = feats.at[nu:, fu + fp + 1].set(1.0)

  wu, bu = params["user_lin"]
  wp, bp = params["prod_lin"]
  w_feat = jnp.concatenate([wu, wp, bu, bp], axis=0)   # (fu+fp+2, D)

  wc1, bc1 = params["conv1"]
  wc2, bc2 = params["conv2"]
  wp1, bp1 = params["pred1"]
  wp2, bp2 = params["pred2"]

  args = (lidx, ridx, feats, w_feat,
          wc1, bc1, wc2, bc2, wp1, bp1, wp2, bp2)

  flops = 2 * (n_nodes * (2 * n_edges) * n_nodes               # adjacency
               + n_nodes * (fu + fp + 2) * emb                 # fused transform
               + 2 * (n_nodes * emb * emb + n_nodes * n_nodes * emb)  # 2x GCN
               + (2 * n_edges) * n_nodes * emb                 # fused gather
               + n_edges * emb * emb + n_edges * emb)          # predictor
  bytes_accessed = (sum(int(a.size) * a.dtype.itemsize for a in args)
                    + 4 * n_edges)
  cost = pl.CostEstimate(flops=int(flops),
                         transcendentals=int(n_nodes + 2 * n_edges),
                         bytes_accessed=int(bytes_accessed))

  vmem = pl.BlockSpec(memory_space=pltpu.MemorySpace.VMEM)
  smem = pl.BlockSpec(memory_space=pltpu.MemorySpace.SMEM)
  in_specs = [vmem] * (len(args) - 1) + [smem]        # bp2 scalar lives in SMEM

  preds = pl.pallas_call(
      functools.partial(_experiment1_kernel, n_edges=n_edges),
      out_shape=jax.ShapeDtypeStruct((1, n_edges), jnp.float32),  # lane-dense
      in_specs=in_specs,
      out_specs=vmem,
      cost_estimate=cost,
  )(*args)
  # TODO(synk): at larger N/E (esp. v7x: 64 MiB VMEM, 2 TCs), grid the adj
  # aggregation over node-row blocks ("parallel") x K ("arbitrary") with bf16
  # MXU inputs / f32 accumulation and set vmem_limit_bytes; unnecessary at
  # these KB-scale shapes.
  return jnp.squeeze(preds, axis=0)


# ----------------------------- pure-JAX reference ----------------------------

def _reference_forward(params, edge_index, user_features, product_features):
  num_users = user_features.shape[0]
  num_products = product_features.shape[0]
  n_nodes = num_users + num_products

  w, b = params["user_lin"]; user_x = user_features @ w + b
  w, b = params["prod_lin"]; prod_x = product_features @ w + b
  x = jnp.concatenate([user_x, prod_x], axis=0)

  src = jnp.concatenate([edge_index[0], edge_index[1]])
  dst = jnp.concatenate([edge_index[1], edge_index[0]])
  adj = jnp.zeros((n_nodes, n_nodes), jnp.float32).at[dst, src].add(1.0)
  adj = adj + jnp.eye(n_nodes, dtype=jnp.float32)
  dis = jax.lax.rsqrt(jnp.sum(adj, axis=1))
  a_hat = dis[:, None] * adj * dis[None, :]

  w, b = params["conv1"]; x = jnp.maximum(a_hat @ (x @ w) + b, 0.0)
  w, b = params["conv2"]; x = a_hat @ (x @ w) + b

  ue = x[edge_index[0]]
  pe = x[edge_index[1]]
  un = ue / jnp.maximum(jnp.linalg.norm(ue, axis=-1, keepdims=True), 1e-12)
  pn = pe / jnp.maximum(jnp.linalg.norm(pe, axis=-1, keepdims=True), 1e-12)
  d = un * pn
  w1, b1 = params["pred1"]; h = jnp.maximum(d @ w1 + b1, 0.0)
  w2, b2 = params["pred2"]
  return jnp.sum(h * w2, axis=-1) + b2[0, 0]


# --------------------------------- Main --------------------------------------

if __name__ == "__main__":
  num_users, num_products = 8, 8
  user_feature_dim, product_feature_dim = 16, 24
  embedding_dim = 32
  num_edges = 16

  key = jax.random.PRNGKey(0)
  k1, k2, k3, k4, k5 = jax.random.split(key, 5)

  user_features = jax.random.normal(k1, (num_users, user_feature_dim), jnp.float32)
  product_features = jax.random.normal(
      k2, (num_products, product_feature_dim), jnp.float32)
  users = jax.random.randint(k3, (num_edges,), 0, num_users)
  prods = jax.random.randint(k4, (num_edges,), num_users, num_users + num_products)
  edge_index = jnp.stack([users, prods], axis=0)

  params = init_params(k5, user_feature_dim, product_feature_dim, embedding_dim)

  out = jax.jit(experiment_1_forward)(
      params, edge_index, user_features, product_features)
  out = jax.block_until_ready(out)

  ref = _reference_forward(params, edge_index, user_features, product_features)
  assert out.shape == (num_edges,)
  assert out.dtype == jnp.float32
  assert jnp.allclose(out, ref, atol=1e-4, rtol=1e-4), (out, ref)
  print("KERNEL_OK")
</pallas_src>

<mosaic_0001>
module attributes {stable_mosaic.version = 11 : i64} {
  func.func @_experiment1_kernel(%arg0: memref<1x32xi32, #tpu.memory_space<vmem>>, %arg1: memref<1x32xi32, #tpu.memory_space<vmem>>, %arg2: memref<16x42xf32, #tpu.memory_space<vmem>>, %arg3: memref<42x32xf32, #tpu.memory_space<vmem>>, %arg4: memref<32x32xf32, #tpu.memory_space<vmem>>, %arg5: memref<1x32xf32, #tpu.memory_space<vmem>>, %arg6: memref<32x32xf32, #tpu.memory_space<vmem>>, %arg7: memref<1x32xf32, #tpu.memory_space<vmem>>, %arg8: memref<32x32xf32, #tpu.memory_space<vmem>>, %arg9: memref<1x32xf32, #tpu.memory_space<vmem>>, %arg10: memref<1x32xf32, #tpu.memory_space<vmem>>, %arg11: memref<1x1xf32, #tpu.memory_space<smem>>, %arg12: memref<1x16xf32, #tpu.memory_space<vmem>>) attributes {dimension_semantics = [], scalar_prefetch = 0 : i64, scratch_operands = 0 : i64, tpu.core_type = #tpu.core_type<tc>} {
    %0 = tpu.iota {dimensions = array<i32: 0>} : vector<16x32xi32>
    %c0 = arith.constant 0 : index
    %c0_0 = arith.constant 0 : index
    %1 = vector.load %arg0[%c0, %c0_0] : memref<1x32xi32, #tpu.memory_space<vmem>>, vector<1x32xi32>
    %2 = vector.broadcast %1 : vector<1x32xi32> to vector<16x32xi32>
    %3 = arith.cmpi eq, %0, %2 : vector<16x32xi32>
    %4 = arith.extui %3 : vector<16x32xi1> to vector<16x32xi32>
    %5 = arith.sitofp %4 : vector<16x32xi32> to vector<16x32xf32>
    %c0_1 = arith.constant 0 : index
    %c0_2 = arith.constant 0 : index
    %6 = vector.load %arg1[%c0_1, %c0_2] : memref<1x32xi32, #tpu.memory_space<vmem>>, vector<1x32xi32>
    %7 = vector.broadcast %6 : vector<1x32xi32> to vector<16x32xi32>
    %8 = arith.cmpi eq, %0, %7 : vector<16x32xi32>
    %9 = arith.extui %8 : vector<16x32xi1> to vector<16x32xi32>
    %10 = arith.sitofp %9 : vector<16x32xi32> to vector<16x32xf32>
    %cst = arith.constant dense<0.000000e+00> : vector<16x16xf32>
    %11 = tpu.matmul %5, %10, %cst {dimension_numbers = #tpu.dot_dimension_numbers<[1], [1], [0], [0], [0, 0, 1, 0], [], []>} : vector<16x32xf32>, vector<16x32xf32>, vector<16x16xf32> -> vector<16x16xf32>
    %cst_3 = arith.constant dense<0.000000e+00> : vector<16xf32>
    %12 = vector.multi_reduction <add>, %11, %cst_3 [1] : vector<16x16xf32> to vector<16xf32>
    %13 = vector.shape_cast %12 : vector<16xf32> to vector<16x1xf32>
    %cst_4 = arith.constant 1.000000e+00 : f32
    %14 = vector.broadcast %cst_4 : f32 to vector<16x1xf32>
    %15 = arith.addf %13, %14 : vector<16x1xf32>
    %16 = math.rsqrt %15 : vector<16x1xf32>
    %c0_5 = arith.constant 0 : index
    %c0_6 = arith.constant 0 : index
    %17 = vector.load %arg2[%c0_5, %c0_6] : memref<16x42xf32, #tpu.memory_space<vmem>>, vector<16x42xf32>
    %c0_7 = arith.constant 0 : index
    %c0_8 = arith.constant 0 : index
    %18 = vector.load %arg3[%c0_7, %c0_8] : memref<42x32xf32, #tpu.memory_space<vmem>>, vector<42x32xf32>
    %cst_9 = arith.constant dense<0.000000e+00> : vector<16x32xf32>
    %19 = tpu.matmul %17, %18, %cst_9 {dimension_numbers = #tpu.dot_dimension_numbers<[1], [0], [0], [1], [0, 0, 1, 1], [], []>} : vector<16x42xf32>, vector<42x32xf32>, vector<16x32xf32> -> vector<16x32xf32>
    %c0_10 = arith.constant 0 : index
    %c0_11 = arith.constant 0 : index
    %20 = vector.load %arg4[%c0_10, %c0_11] : memref<32x32xf32, #tpu.memory_space<vmem>>, vector<32x32xf32>
    %cst_12 = arith.constant dense<0.000000e+00> : vector<16x32xf32>
    %21 = tpu.matmul %19, %20, %cst_12 {dimension_numbers = #tpu.dot_dimension_numbers<[1], [0], [0], [1], [0, 0, 1, 1], [], []>} : vector<16x32xf32>, vector<32x32xf32>, vector<16x32xf32> -> vector<16x32xf32>
    %22 = vector.broadcast %16 : vector<16x1xf32> to vector<16x32xf32>
    %23 = arith.mulf %22, %21 : vector<16x32xf32>
    %cst_13 = arith.constant dense<0.000000e+00> : vector<16x32xf32>
    %24 = tpu.matmul %11, %23, %cst_13 {dimension_numbers = #tpu.dot_dimension_numbers<[1], [0], [0], [1], [0, 0, 1, 1], [], []>} : vector<16x16xf32>, vector<16x32xf32>, vector<16x32xf32> -> vector<16x32xf32>
    %25 = arith.addf %24, %23 : vector<16x32xf32>
    %26 = vector.broadcast %16 : vector<16x1xf32> to vector<16x32xf32>
    %27 = arith.mulf %26, %25 : vector<16x32xf32>
    %c0_14 = arith.constant 0 : index
    %c0_15 = arith.constant 0 : index
    %28 = vector.load %arg5[%c0_14, %c0_15] : memref<1x32xf32, #tpu.memory_space<vmem>>, vector<1x32xf32>
    %29 = vector.broadcast %28 : vector<1x32xf32> to vector<16x32xf32>
    %30 = arith.addf %27, %29 : vector<16x32xf32>
    %cst_16 = arith.constant 0.000000e+00 : f32
    %31 = vector.broadcast %cst_16 : f32 to vector<16x32xf32>
    %32 = arith.maximumf %30, %31 : vector<16x32xf32>
    %c0_17 = arith.constant 0 : index
    %c0_18 = arith.constant 0 : index
    %33 = vector.load %arg6[%c0_17, %c0_18] : memref<32x32xf32, #tpu.memory_space<vmem>>, vector<32x32xf32>
    %cst_19 = arith.constant dense<0.000000e+00> : vector<16x32xf32>
    %34 = tpu.matmul %32, %33, %cst_19 {dimension_numbers = #tpu.dot_dimension_numbers<[1], [0], [0], [1], [0, 0, 1, 1], [], []>} : vector<16x32xf32>, vector<32x32xf32>, vector<16x32xf32> -> vector<16x32xf32>
    %35 = vector.broadcast %16 : vector<16x1xf32> to vector<16x32xf32>
    %36 = arith.mulf %35, %34 : vector<16x32xf32>
    %cst_20 = arith.constant dense<0.000000e+00> : vector<16x32xf32>
    %37 = tpu.matmul %11, %36, %cst_20 {dimension_numbers = #tpu.dot_dimension_numbers<[1], [0], [0], [1], [0, 0, 1, 1], [], []>} : vector<16x16xf32>, vector<16x32xf32>, vector<16x32xf32> -> vector<16x32xf32>
    %38 = arith.addf %37, %36 : vector<16x32xf32>
    %39 = vector.broadcast %16 : vector<16x1xf32> to vector<16x32xf32>
    %40 = arith.mulf %39, %38 : vector<16x32xf32>
    %c0_21 = arith.constant 0 : index
    %c0_22 = arith.constant 0 : index
    %41 = vector.load %arg7[%c0_21, %c0_22] : memref<1x32xf32, #tpu.memory_space<vmem>>, vector<1x32xf32>
    %42 = vector.broadcast %41 : vector<1x32xf32> to vector<16x32xf32>
    %43 = arith.addf %40, %42 : vector<16x32xf32>
    %cst_23 = arith.constant dense<0.000000e+00> : vector<32x32xf32>
    %44 = tpu.matmul %5, %43, %cst_23 {dimension_numbers = #tpu.dot_dimension_numbers<[0], [0], [1], [1], [0, 1, 1, 1], [], []>} : vector<16x32xf32>, vector<16x32xf32>, vector<32x32xf32> -> vector<32x32xf32>
    %45 = arith.mulf %44, %44 : vector<32x32xf32>
    %cst_24 = arith.constant dense<0.000000e+00> : vector<32xf32>
    %46 = vector.multi_reduction <add>, %45, %cst_24 [1] : vector<32x32xf32> to vector<32xf32>
    %47 = vector.shape_cast %46 : vector<32xf32> to vector<32x1xf32>
    %cst_25 = arith.constant 1.000000e-24 : f32
    %48 = vector.broadcast %cst_25 : f32 to vector<32x1xf32>
    %49 = arith.maximumf %47, %48 : vector<32x1xf32>
    %50 = math.rsqrt %49 : vector<32x1xf32>
    %51 = vector.broadcast %50 : vector<32x1xf32> to vector<32x32xf32>
    %52 = arith.mulf %44, %51 : vector<32x32xf32>
    %53 = vector.extract_strided_slice %52 {offsets = [0, 0], sizes = [16, 32], strides = [1, 1]} : vector<32x32xf32> to vector<16x32xf32>
    %54 = vector.extract_strided_slice %52 {offsets = [16, 0], sizes = [16, 32], strides = [1, 1]} : vector<32x32xf32> to vector<16x32xf32>
    %55 = arith.mulf %53, %54 : vector<16x32xf32>
    %c0_26 = arith.constant 0 : index
    %c0_27 = arith.constant 0 : index
    %56 = vector.load %arg8[%c0_26, %c0_27] : memref<32x32xf32, #tpu.memory_space<vmem>>, vector<32x32xf32>
    %cst_28 = arith.constant dense<0.000000e+00> : vector<16x32xf32>
    %57 = tpu.matmul %55, %56, %cst_28 {dimension_numbers = #tpu.dot_dimension_numbers<[1], [0], [0], [1], [0, 0, 1, 1], [], []>} : vector<16x32xf32>, vector<32x32xf32>, vector<16x32xf32> -> vector<16x32xf32>
    %c0_29 = arith.constant 0 : index
    %c0_30 = arith.constant 0 : index
    %58 = vector.load %arg9[%c0_29, %c0_30] : memref<1x32xf32, #tpu.memory_space<vmem>>, vector<1x32xf32>
    %59 = vector.broadcast %58 : vector<1x32xf32> to vector<16x32xf32>
    %60 = arith.addf %57, %59 : vector<16x32xf32>
    %cst_31 = arith.constant 0.000000e+00 : f32
    %61 = vector.broadcast %cst_31 : f32 to vector<16x32xf32>
    %62 = arith.maximumf %60, %61 : vector<16x32xf32>
    %c0_32 = arith.constant 0 : index
    %c0_33 = arith.constant 0 : index
    %63 = vector.load %arg10[%c0_32, %c0_33] : memref<1x32xf32, #tpu.memory_space<vmem>>, vector<1x32xf32>
    %cst_34 = arith.constant dense<0.000000e+00> : vector<1x16xf32>
    %64 = tpu.matmul %63, %62, %cst_34 {dimension_numbers = #tpu.dot_dimension_numbers<[1], [1], [0], [0], [0, 0, 1, 0], [], []>} : vector<1x32xf32>, vector<16x32xf32>, vector<1x16xf32> -> vector<1x16xf32>
    %c0_35 = arith.constant 0 : index
    %c0_36 = arith.constant 0 : index
    %65 = memref.load %arg11[%c0_35, %c0_36] : memref<1x1xf32, #tpu.memory_space<smem>>
    %66 = vector.broadcast %65 : f32 to vector<1x16xf32>
    %67 = arith.addf %64, %66 : vector<1x16xf32>
    %c0_37 = arith.constant 0 : index
    %c0_38 = arith.constant 0 : index
    %68 = vector.load %arg12[%c0_37, %c0_38] : memref<1x16xf32, #tpu.memory_space<vmem>>, vector<1x16xf32>
    tpu.vector_store %arg12[%c0_37, %c0_38], %67 {strides = array<i32>} : memref<1x16xf32, #tpu.memory_space<vmem>>, vector<1x16xf32>,
    return
  }
}

</mosaic_0001>

<llo_original>
// kernel: experiment_1_forward.1
$region0: #{experiment_1_forward.1}
  #allocation0 [shape = 'u32[]', space=smem, size = 0x4, offset = 0x4, fixed_abs, tag = 'smem constant byte address 0x4 - core index']
  #allocation1 [shape = 'u32[144,128]{1,0:T(1,128)}', space=vmem, size = 0x12000, scoped, tag = 'internal scratch']
  #allocation2 [shape = 'f32[1,1]{1,0:T(1,128)S(6)}', space=smem, size = 0x200, scoped, tag = 'scoped memory for experiment_1_forward.1']
  %s0 = inlined_call_operand.vmem [shape: s32[1,32], index: 0, kind: input, shape index: {}]
  %s1 = inlined_call_operand.vmem [shape: s32[1,32], index: 1, kind: input, shape index: {}]
  %s2 = inlined_call_operand.vmem [shape: f32[16,42], index: 2, kind: input, shape index: {}]
  %s3 = inlined_call_operand.vmem [shape: f32[42,32], index: 3, kind: input, shape index: {}]
  %s4 = inlined_call_operand.vmem [shape: f32[32,32], index: 4, kind: input, shape index: {}]
  %s5 = inlined_call_operand.vmem [shape: f32[1,32], index: 5, kind: input, shape index: {}]
  %s6 = inlined_call_operand.vmem [shape: f32[32,32], index: 6, kind: input, shape index: {}]
  %s7 = inlined_call_operand.vmem [shape: f32[1,32], index: 7, kind: input, shape index: {}]
  %s8 = inlined_call_operand.vmem [shape: f32[32,32], index: 8, kind: input, shape index: {}]
  %s9 = inlined_call_operand.vmem [shape: f32[1,32], index: 9, kind: input, shape index: {}]
  %s10 = inlined_call_operand.vmem [shape: f32[1,32], index: 10, kind: input, shape index: {}]
  %s11 = inlined_call_operand.<no memory space> [shape: f32[1,1], index: 11, kind: input, shape index: {}]
  %s12 = inlined_call_operand.hbm [shape: f32[1,16], index: 12, kind: output, shape index: {}]
  %s13 = sld [smem:[#allocation0]]
  $region58: #{experiment_1_forward.1} parent=0
    _
  %s15 = ssub.s32 1, %s13
  %s16 = scalar_select 0, %s15, %s13
  %17 = sst [smem:[#allocation2]] %s11
  $region1: #{experiment_1_forward.1} parent=0
    #allocation3 [shape = 'u8[512]{0}', space=vmem, size = 0x400, scoped, tag = 'output window, operand 0, single buffered']
    #allocation4 [shape = 's32[1]{0}', space=sflag, size = 0x4, scoped, tag = 'scoped memory for experiment_1_forward.1']
    %18 = vsyncpa [#allocation4], 0
    // Predicated region
    $region2: #{experiment_1_forward.1} parent=1 // pred_check
      _
    $region3: #{experiment_1_forward.1} parent=1 // pred_check_branch
      %20 = sbr.rel (0) target = $region5
    $region4: #{experiment_1_forward.1} parent=1 // pred_region
      _
    $region5: #{experiment_1_forward.1} parent=1 // pred_fallthru
      _
    // Predicated region
    $region6: #{experiment_1_forward.1} parent=1 // pred_check
      _
    $region7: #{experiment_1_forward.1} parent=1 // pred_check_branch
      %22 = sbr.rel (0) target = $region9
    $region8: #{experiment_1_forward.1} parent=1 // pred_region
      _
    $region9: #{experiment_1_forward.1} parent=1 // pred_fallthru
      _
    // Predicated region
    $region10: #{experiment_1_forward.1} parent=1 // pred_check
      _
    $region11: #{experiment_1_forward.1} parent=1 // pred_check_branch
      %24 = sbr.rel (0) target = $region13
    $region12: #{experiment_1_forward.1} parent=1 // pred_region
      _
    $region13: #{experiment_1_forward.1} parent=1 // pred_fallthru
      _
    // Predicated region
    $region14: #{experiment_1_forward.1} parent=1 // pred_check
      _
    $region15: #{experiment_1_forward.1} parent=1 // pred_check_branch
      %26 = sbr.rel (0) target = $region17
    $region16: #{experiment_1_forward.1} parent=1 // pred_region
      _
    $region17: #{experiment_1_forward.1} parent=1 // pred_fallthru
      _
    // Predicated region
    $region18: #{experiment_1_forward.1} parent=1 // pred_check
      _
    $region19: #{experiment_1_forward.1} parent=1 // pred_check_branch
      %28 = sbr.rel (0) target = $region21
    $region20: #{experiment_1_forward.1} parent=1 // pred_region
      _
    $region21: #{experiment_1_forward.1} parent=1 // pred_fallthru
      _
    // Predicated region
    $region22: #{experiment_1_forward.1} parent=1 // pred_check
      _
    $region23: #{experiment_1_forward.1} parent=1 // pred_check_branch
      %30 = sbr.rel (0) target = $region25
    $region24: #{experiment_1_forward.1} parent=1 // pred_region
      _
    $region25: #{experiment_1_forward.1} parent=1 // pred_fallthru
      _
    // Predicated region
    $region26: #{experiment_1_forward.1} parent=1 // pred_check
      _
    $region27: #{experiment_1_forward.1} parent=1 // pred_check_branch
      %32 = sbr.rel (0) target = $region29
    $region28: #{experiment_1_forward.1} parent=1 // pred_region
      _
    $region29: #{experiment_1_forward.1} parent=1 // pred_fallthru
      _
    // Predicated region
    $region30: #{experiment_1_forward.1} parent=1 // pred_check
      _
    $region31: #{experiment_1_forward.1} parent=1 // pred_check_branch
      %34 = sbr.rel (0) target = $region33
    $region32: #{experiment_1_forward.1} parent=1 // pred_region
      _
    $region33: #{experiment_1_forward.1} parent=1 // pred_fallthru
      _
    // Predicated region
    $region34: #{experiment_1_forward.1} parent=1 // pred_check
      _
    $region35: #{experiment_1_forward.1} parent=1 // pred_check_branch
      %36 = sbr.rel (0) target = $region37
    $region36: #{experiment_1_forward.1} parent=1 // pred_region
      _
    $region37: #{experiment_1_forward.1} parent=1 // pred_fallthru
      _
    // Predicated region
    $region38: #{experiment_1_forward.1} parent=1 // pred_check
      _
    $region39: #{experiment_1_forward.1} parent=1 // pred_check_branch
      %38 = sbr.rel (0) target = $region41
    $region40: #{experiment_1_forward.1} parent=1 // pred_region
      _
    $region41: #{experiment_1_forward.1} parent=1 // pred_fallthru
      _
    // Predicated region
    $region42: #{experiment_1_forward.1} parent=1 // pred_check
      _
    $region43: #{experiment_1_forward.1} parent=1 // pred_check_branch
      %40 = sbr.rel (0) target = $region45
    $region44: #{experiment_1_forward.1} parent=1 // pred_region
      _
    $region45: #{experiment_1_forward.1} parent=1 // pred_fallthru
      _
    // Predicated region
    $region46: #{experiment_1_forward.1} parent=1 // pred_check
      _
    $region47: #{experiment_1_forward.1} parent=1 // pred_check_branch
      %42 = sbr.rel (0) target = $region49
    $region48: #{experiment_1_forward.1} parent=1 // pred_region
      _
    $region49: #{experiment_1_forward.1} parent=1 // pred_fallthru
      _
    %v43 = vlaneseq
    %v44 = vshrl.u32 %v43, 7
    %v45 = vadd.s32 %v44, 8
    %v46 = vld [vmem:[%s0] sm:$0x1]
    %v47 = vlaneseq
    %v48 = vshrl.u32 %v47, 7
    %v49 = vsub.s32 0, %v48
    %v50 = vrot.slane %v46, %v49
    %vm51 = vcmp.eq.s32.totalorder %v44, %v50
    %vm52 = vcmp.eq.s32.totalorder %v45, %v50
    %v53 = vsel %vm51, 1, 0
    %v54 = vsel %vm52, 1, 0
    %v55 = vcvt.s32.f32 %v53
    %v56 = vcvt.s32.f32 %v54
    %v57 = vld [vmem:[%s1] sm:$0x1]
    %v58 = vlaneseq
    %v59 = vshrl.u32 %v58, 7
    %v60 = vsub.s32 0, %v59
    %v61 = vrot.slane %v57, %v60
    %vm62 = vcmp.eq.s32.totalorder %v44, %v61
    %vm63 = vcmp.eq.s32.totalorder %v45, %v61
    %v64 = vsel %vm62, 1, 0
    %v65 = vsel %vm63, 1, 0
    %v66 = vcvt.s32.f32 %v64
    %v67 = vcvt.s32.f32 %v65
    %vm68 = vcmask 261120
    %v70 = vsel %vm68, %v55, 0
    %v73 = vsel %vm68, %v56, 0
    %v76 = vsel %vm68, %v66, 0
    %v79 = vsel %vm68, %v67, 0
    %81 = vmatprep.subr.mxu0 0.0
    %82 = vmatpush1.xpose.msra.mxu0 %v76
    %83 = vmatprep.subr.mxu0 0.0
    %84 = vmatpush1.xpose.msra.mxu0 %v79
    %85 = vmatprep.subr.mxu0 0.0
    %86 = vmatpush1.xpose.msra.mxu0 0.0
    %87 = vmatprep.subr.mxu0 0.0
    %88 = vmatpush1.xpose.msra.mxu0 0.0
    %89 = vmatprep.subr.mxu0 0.0
    %90 = vmatpush1.xpose.msra.mxu0 0.0
    %91 = vmatprep.subr.mxu0 0.0
    %92 = vmatpush1.xpose.msra.mxu0 0.0
    %93 = vmatprep.subr.mxu0 0.0
    %94 = vmatpush1.xpose.msra.mxu0 0.0
    %95 = vmatprep.subr.mxu0 0.0
    %96 = vmatpush1.xpose.msra.mxu0 0.0
    %97 = vmatprep.subr.mxu0 0.0
    %98 = vmatpush1.xpose.msra.mxu0 0.0
    %99 = vmatprep.subr.mxu0 0.0
    %100 = vmatpush1.xpose.msra.mxu0 0.0
    %101 = vmatprep.subr.mxu0 0.0
    %102 = vmatpush1.xpose.msra.mxu0 0.0
    %103 = vmatprep.subr.mxu0 0.0
    %104 = vmatpush1.xpose.msra.mxu0 0.0
    %105 = vmatprep.subr.mxu0 0.0
    %106 = vmatpush1.xpose.msra.mxu0 0.0
    %107 = vmatprep.subr.mxu0 0.0
    %108 = vmatpush1.xpose.msra.mxu0 0.0
    %109 = vmatprep.subr.mxu0 0.0
    %110 = vmatpush1.xpose.msra.mxu0 0.0
    %111 = vmatprep.subr.mxu0 0.0
    %112 = vmatpush1.xpose.msra.mxu0 0.0
    %113 = vmatprep.subr.mxu0 0.0
    %114 = vmatpush1.xpose.msra.mxu0 0.0
    %115 = vmatprep.subr.mxu0 0.0
    %116 = vmatpush1.xpose.msra.mxu0 0.0
    %117 = vmatprep.subr.mxu0 0.0
    %118 = vmatpush1.xpose.msra.mxu0 0.0
    %119 = vmatprep.subr.mxu0 0.0
    %120 = vmatpush1.xpose.msra.mxu0 0.0
    %121 = vmatprep.subr.mxu0 0.0
    %122 = vmatpush1.xpose.msra.mxu0 0.0
    %123 = vmatprep.subr.mxu0 0.0
    %124 = vmatpush1.xpose.msra.mxu0 0.0
    %125 = vmatprep.subr.mxu0 0.0
    %126 = vmatpush1.xpose.msra.mxu0 0.0
    %127 = vmatprep.subr.mxu0 0.0
    %128 = vmatpush1.xpose.msra.mxu0 0.0
    %129 = vmatprep.subr.mxu0 0.0
    %130 = vmatpush1.xpose.msra.mxu0 0.0
    %131 = vmatprep.subr.mxu0 0.0
    %132 = vmatpush1.xpose.msra.mxu0 0.0
    %133 = vmatprep.subr.mxu0 0.0
    %134 = vmatpush1.xpose.msra.mxu0 0.0
    %135 = vmatprep.subr.mxu0 0.0
    %136 = vmatpush1.xpose.msra.mxu0 0.0
    %137 = vmatprep.subr.mxu0 0.0
    %138 = vmatpush1.xpose.msra.mxu0 0.0
    %139 = vmatprep.subr.mxu0 0.0
    %140 = vmatpush1.xpose.msra.mxu0 0.0
    %141 = vmatprep.subr.mxu0 0.0
    %142 = vmatpush1.xpose.msra.mxu0 0.0
    %143 = vmatprep.subr.mxu0 0.0
    %144 = vmatpush1.xpose.msra.mxu0 0.0
    %145 = vmatprep.mubr.f32.mxu0 0.0
    %146 = vmatmul.mubr.f32.gmra.mrb[0].mxu0 %v70
    %v147 = vpop.f32.mrb[0].mxu0
    %v148 = vadd.f32 0.0, %v147
    %v149 = vpop.f32.mrb[0].mxu0
    %150 = vmatprep.mubr.f32.mxu0 0.0
    %151 = vmatmul.mubr.f32.gmra.mrb[0].mxu0 %v73
    %v152 = vpop.f32.mrb[0].mxu0
    %v153 = vadd.f32 0.0, %v152
    %v154 = vpop.f32.mrb[0].mxu0
    %155 = vdwg.mxu0
    %vm156 = vcmask 130048
    %v157 = vsel %vm156, %v148, 0.0
    %158 = vadd.xlane.f32.xlu0 %v157
    %v159 = vpop.xlane.xlu0 %158
    %v160 = vsel %vm156, %v153, 0.0
    %161 = vadd.xlane.f32.xlu0 %v160
    %v162 = vpop.xlane.xlu0 %161
    %v163 = vadd.f32 %v159, 1.0
    %v164 = vadd.f32 %v162, 1.0
    %v165 = vrsqrt.pop %v163
    %v166 = vrsqrt.pop %v164
    %v167 = vld [vmem:[%s2] sm:$0xff]
    %v168 = vld [vmem:[%s2 + $0x8] sm:$0xff]
    %v169 = vld [vmem:[%s3] sm:$0xff]
    %v170 = vld [vmem:[%s3 + $0x8] sm:$0xff]
    %v171 = vld [vmem:[%s3 + $0x10] sm:$0xff]
    %v172 = vld [vmem:[%s3 + $0x18] sm:$0xff]
    %v173 = vld [vmem:[%s3 + $0x20] sm:$0xff]
    %v174 = vld [vmem:[%s3 + $0x28] sm:$0x3]
    %vm175 = vcmask 343040
    %v177 = vsel %vm175, %v167, 0
    %v180 = vsel %vm175, %v168, 0
    %vm182 = vcmask 1041408
    %v184 = vsel %vm182, %v174, 0
    %186 = vmatprep.subr.mxu0 0.0
    %187 = vmatpush1.msra.mxu0 %v169
    %188 = vmatprep.subr.mxu0 0.0
    %189 = vmatpush1.msra.mxu0 %v170
    %190 = vmatprep.subr.mxu0 0.0
    %191 = vmatpush1.msra.mxu0 %v171
    %192 = vmatprep.subr.mxu0 0.0
    %193 = vmatpush1.msra.mxu0 %v172
    %194 = vmatprep.subr.mxu0 0.0
    %195 = vmatpush1.msra.mxu0 %v173
    %196 = vmatprep.subr.mxu0 0.0
    %197 = vmatpush1.msra.mxu0 %v184
    %198 = vmatprep.subr.mxu0 0.0
    %199 = vmatpush1.msra.mxu0 0.0
    %200 = vmatprep.subr.mxu0 0.0
    %201 = vmatpush1.msra.mxu0 0.0
    %202 = vmatprep.subr.mxu0 0.0
    %203 = vmatpush1.msra.mxu0 0.0
    %204 = vmatprep.subr.mxu0 0.0
    %205 = vmatpush1.msra.mxu0 0.0
    %206 = vmatprep.subr.mxu0 0.0
    %207 = vmatpush1.msra.mxu0 0.0
    %208 = vmatprep.subr.mxu0 0.0
    %209 = vmatpush1.msra.mxu0 0.0
    %210 = vmatprep.subr.mxu0 0.0
    %211 = vmatpush1.msra.mxu0 0.0
    %212 = vmatprep.subr.mxu0 0.0
    %213 = vmatpush1.msra.mxu0 0.0
    %214 = vmatprep.subr.mxu0 0.0
    %215 = vmatpush1.msra.mxu0 0.0
    %216 = vmatprep.subr.mxu0 0.0
    %217 = vmatpush1.msra.mxu0 0.0
    %218 = vmatprep.subr.mxu0 0.0
    %219 = vmatpush1.msra.mxu0 0.0
    %220 = vmatprep.subr.mxu0 0.0
    %221 = vmatpush1.msra.mxu0 0.0
    %222 = vmatprep.subr.mxu0 0.0
    %223 = vmatpush1.msra.mxu0 0.0
    %224 = vmatprep.subr.mxu0 0.0
    %225 = vmatpush1.msra.mxu0 0.0
    %226 = vmatprep.subr.mxu0 0.0
    %227 = vmatpush1.msra.mxu0 0.0
    %228 = vmatprep.subr.mxu0 0.0
    %229 = vmatpush1.msra.mxu0 0.0
    %230 = vmatprep.subr.mxu0 0.0
    %231 = vmatpush1.msra.mxu0 0.0
    %232 = vmatprep.subr.mxu0 0.0
    %233 = vmatpush1.msra.mxu0 0.0
    %234 = vmatprep.subr.mxu0 0.0
    %235 = vmatpush1.msra.mxu0 0.0
    %236 = vmatprep.subr.mxu0 0.0
    %237 = vmatpush1.msra.mxu0 0.0
    %238 = vmatprep.subr.mxu0 0.0
    %239 = vmatpush1.msra.mxu0 0.0
    %240 = vmatprep.subr.mxu0 0.0
    %241 = vmatpush1.msra.mxu0 0.0
    %242 = vmatprep.subr.mxu0 0.0
    %243 = vmatpush1.msra.mxu0 0.0
    %244 = vmatprep.subr.mxu0 0.0
    %245 = vmatpush1.msra.mxu0 0.0
    %246 = vmatprep.subr.mxu0 0.0
    %247 = vmatpush1.msra.mxu0 0.0
    %248 = vmatprep.subr.mxu0 0.0
    %249 = vmatpush1.msra.mxu0 0.0
    %250 = vmatprep.mubr.f32.mxu0 0.0
    %251 = vmatmul.mubr.f32.gmra.mrb[0].mxu0 %v177
    %v252 = vpop.f32.mrb[0].mxu0
    %v253 = vadd.f32 0.0, %v252
    %v254 = vpop.f32.mrb[0].mxu0
    %255 = vmatprep.mubr.f32.mxu0 0.0
    %256 = vmatmul.mubr.f32.gmra.mrb[0].mxu0 %v180
    %v257 = vpop.f32.mrb[0].mxu0
    %v258 = vadd.f32 0.0, %v257
    %v259 = vpop.f32.mrb[0].mxu0
    %260 = vdwg.mxu0
    %v261 = vld [vmem:[%s4] sm:$0xff]
    %v262 = vld [vmem:[%s4 + $0x8] sm:$0xff]
    %v263 = vld [vmem:[%s4 + $0x10] sm:$0xff]
    %v264 = vld [vmem:[%s4 + $0x18] sm:$0xff]
    %v266 = vsel %vm68, %v253, 0
    %v269 = vsel %vm68, %v258, 0
    %271 = vmatprep.subr.mxu0 0.0
    %272 = vmatpush1.msra.mxu0 %v261
    %273 = vmatprep.subr.mxu0 0.0
    %274 = vmatpush1.msra.mxu0 %v262
    %275 = vmatprep.subr.mxu0 0.0
    %276 = vmatpush1.msra.mxu0 %v263
    %277 = vmatprep.subr.mxu0 0.0
    %278 = vmatpush1.msra.mxu0 %v264
    %279 = vmatprep.subr.mxu0 0.0
    %280 = vmatpush1.msra.mxu0 0.0
    %281 = vmatprep.subr.mxu0 0.0
    %282 = vmatpush1.msra.mxu0 0.0
    %283 = vmatprep.subr.mxu0 0.0
    %284 = vmatpush1.msra.mxu0 0.0
    %285 = vmatprep.subr.mxu0 0.0
    %286 = vmatpush1.msra.mxu0 0.0
    %287 = vmatprep.subr.mxu0 0.0
    %288 = vmatpush1.msra.mxu0 0.0
    %289 = vmatprep.subr.mxu0 0.0
    %290 = vmatpush1.msra.mxu0 0.0
    %291 = vmatprep.subr.mxu0 0.0
    %292 = vmatpush1.msra.mxu0 0.0
    %293 = vmatprep.subr.mxu0 0.0
    %294 = vmatpush1.msra.mxu0 0.0
    %295 = vmatprep.subr.mxu0 0.0
    %296 = vmatpush1.msra.mxu0 0.0
    %297 = vmatprep.subr.mxu0 0.0
    %298 = vmatpush1.msra.mxu0 0.0
    %299 = vmatprep.subr.mxu0 0.0
    %300 = vmatpush1.msra.mxu0 0.0
    %301 = vmatprep.subr.mxu0 0.0
    %302 = vmatpush1.msra.mxu0 0.0
    %303 = vmatprep.subr.mxu0 0.0
    %304 = vmatpush1.msra.mxu0 0.0
    %305 = vmatprep.subr.mxu0 0.0
    %306 = vmatpush1.msra.mxu0 0.0
    %307 = vmatprep.subr.mxu0 0.0
    %308 = vmatpush1.msra.mxu0 0.0
    %309 = vmatprep.subr.mxu0 0.0
    %310 = vmatpush1.msra.mxu0 0.0
    %311 = vmatprep.subr.mxu0 0.0
    %312 = vmatpush1.msra.mxu0 0.0
    %313 = vmatprep.subr.mxu0 0.0
    %314 = vmatpush1.msra.mxu0 0.0
    %315 = vmatprep.subr.mxu0 0.0
    %316 = vmatpush1.msra.mxu0 0.0
    %317 = vmatprep.subr.mxu0 0.0
    %318 = vmatpush1.msra.mxu0 0.0
    %319 = vmatprep.subr.mxu0 0.0
    %320 = vmatpush1.msra.mxu0 0.0
    %321 = vmatprep.subr.mxu0 0.0
    %322 = vmatpush1.msra.mxu0 0.0
    %323 = vmatprep.subr.mxu0 0.0
    %324 = vmatpush1.msra.mxu0 0.0
    %325 = vmatprep.subr.mxu0 0.0
    %326 = vmatpush1.msra.mxu0 0.0
    %327 = vmatprep.subr.mxu0 0.0
    %328 = vmatpush1.msra.mxu0 0.0
    %329 = vmatprep.subr.mxu0 0.0
    %330 = vmatpush1.msra.mxu0 0.0
    %331 = vmatprep.subr.mxu0 0.0
    %332 = vmatpush1.msra.mxu0 0.0
    %333 = vmatprep.subr.mxu0 0.0
    %334 = vmatpush1.msra.mxu0 0.0
    %335 = vmatprep.mubr.f32.mxu0 0.0
    %336 = vmatmul.mubr.f32.gmra.mrb[0].mxu0 %v266
    %v337 = vpop.f32.mrb[0].mxu0
    %v338 = vadd.f32 0.0, %v337
    %v339 = vpop.f32.mrb[0].mxu0
    %340 = vmatprep.mubr.f32.mxu0 0.0
    %341 = vmatmul.mubr.f32.gmra.mrb[0].mxu0 %v269
    %v342 = vpop.f32.mrb[0].mxu0
    %v343 = vadd.f32 0.0, %v342
    %v344 = vpop.f32.mrb[0].mxu0
    %345 = vdwg.mxu0
    %v346 = vmul.f32 %v165, %v338
    %v347 = vmul.f32 %v166, %v343
    %v349 = vsel %vm156, %v148, 0
    %v352 = vsel %vm156, %v153, 0
    %354 = vmatprep.subr.mxu0 0.0
    %355 = vmatpush1.msra.mxu0 %v346
    %356 = vmatprep.subr.mxu0 0.0
    %357 = vmatpush1.msra.mxu0 %v347
    %358 = vmatprep.subr.mxu0 0.0
    %359 = vmatpush1.msra.mxu0 0.0
    %360 = vmatprep.subr.mxu0 0.0
    %361 = vmatpush1.msra.mxu0 0.0
    %362 = vmatprep.subr.mxu0 0.0
    %363 = vmatpush1.msra.mxu0 0.0
    %364 = vmatprep.subr.mxu0 0.0
    %365 = vmatpush1.msra.mxu0 0.0
    %366 = vmatprep.subr.mxu0 0.0
    %367 = vmatpush1.msra.mxu0 0.0
    %368 = vmatprep.subr.mxu0 0.0
    %369 = vmatpush1.msra.mxu0 0.0
    %370 = vmatprep.subr.mxu0 0.0
    %371 = vmatpush1.msra.mxu0 0.0
    %372 = vmatprep.subr.mxu0 0.0
    %373 = vmatpush1.msra.mxu0 0.0
    %374 = vmatprep.subr.mxu0 0.0
    %375 = vmatpush1.msra.mxu0 0.0
    %376 = vmatprep.subr.mxu0 0.0
    %377 = vmatpush1.msra.mxu0 0.0
    %378 = vmatprep.subr.mxu0 0.0
    %379 = vmatpush1.msra.mxu0 0.0
    %380 = vmatprep.subr.mxu0 0.0
    %381 = vmatpush1.msra.mxu0 0.0
    %382 = vmatprep.subr.mxu0 0.0
    %383 = vmatpush1.msra.mxu0 0.0
    %384 = vmatprep.subr.mxu0 0.0
    %385 = vmatpush1.msra.mxu0 0.0
    %386 = vmatprep.subr.mxu0 0.0
    %387 = vmatpush1.msra.mxu0 0.0
    %388 = vmatprep.subr.mxu0 0.0
    %389 = vmatpush1.msra.mxu0 0.0
    %390 = vmatprep.subr.mxu0 0.0
    %391 = vmatpush1.msra.mxu0 0.0
    %392 = vmatprep.subr.mxu0 0.0
    %393 = vmatpush1.msra.mxu0 0.0
    %394 = vmatprep.subr.mxu0 0.0
    %395 = vmatpush1.msra.mxu0 0.0
    %396 = vmatprep.subr.mxu0 0.0
    %397 = vmatpush1.msra.mxu0 0.0
    %398 = vmatprep.subr.mxu0 0.0
    %399 = vmatpush1.msra.mxu0 0.0
    %400 = vmatprep.subr.mxu0 0.0
    %401 = vmatpush1.msra.mxu0 0.0
    %402 = vmatprep.subr.mxu0 0.0
    %403 = vmatpush1.msra.mxu0 0.0
    %404 = vmatprep.subr.mxu0 0.0
    %405 = vmatpush1.msra.mxu0 0.0
    %406 = vmatprep.subr.mxu0 0.0
    %407 = vmatpush1.msra.mxu0 0.0
    %408 = vmatprep.subr.mxu0 0.0
    %409 = vmatpush1.msra.mxu0 0.0
    %410 = vmatprep.subr.mxu0 0.0
    %411 = vmatpush1.msra.mxu0 0.0
    %412 = vmatprep.subr.mxu0 0.0
    %413 = vmatpush1.msra.mxu0 0.0
    %414 = vmatprep.subr.mxu0 0.0
    %415 = vmatpush1.msra.mxu0 0.0
    %416 = vmatprep.subr.mxu0 0.0
    %417 = vmatpush1.msra.mxu0 0.0
    %418 = vmatprep.mubr.f32.mxu0 0.0
    %419 = vmatmul.mubr.f32.gmra.mrb[0].mxu0 %v349
    %v420 = vpop.f32.mrb[0].mxu0
    %v421 = vadd.f32 %v346, %v420
    %v422 = vpop.f32.mrb[0].mxu0
    %423 = vmatprep.mubr.f32.mxu0 0.0
    %424 = vmatmul.mubr.f32.gmra.mrb[0].mxu0 %v352
    %v425 = vpop.f32.mrb[0].mxu0
    %v426 = vadd.f32 %v347, %v425
    %v427 = vpop.f32.mrb[0].mxu0
    %428 = vdwg.mxu0
    %v429 = vmul.f32 %v165, %v421
    %v430 = vmul.f32 %v166, %v426
    %v431 = vld [vmem:[%s5] sm:$0x1]
    %v433 = vlaneseq
    %v434 = vshrl.u32 %v433, 7
    %v435 = vsub.s32 0, %v434
    %v436 = vrot.slane %v431, %v435
    %v438 = vadd.f32 %v429, %v436
    %v439 = vadd.f32 %v430, %v436
    %v440 = vmax.f32 %v438, 0.0
    %v441 = vmax.f32 %v439, 0.0
    %v442 = vld [vmem:[%s6] sm:$0xff]
    %v443 = vld [vmem:[%s6 + $0x8] sm:$0xff]
    %v444 = vld [vmem:[%s6 + $0x10] sm:$0xff]
    %v445 = vld [vmem:[%s6 + $0x18] sm:$0xff]
    %v447 = vsel %vm68, %v440, 0
    %v450 = vsel %vm68, %v441, 0
    %452 = vmatprep.subr.mxu0 0.0
    %453 = vmatpush1.msra.mxu0 %v442
    %454 = vmatprep.subr.mxu0 0.0
    %455 = vmatpush1.msra.mxu0 %v443
    %456 = vmatprep.subr.mxu0 0.0
    %457 = vmatpush1.msra.mxu0 %v444
    %458 = vmatprep.subr.mxu0 0.0
    %459 = vmatpush1.msra.mxu0 %v445
    %460 = vmatprep.subr.mxu0 0.0
    %461 = vmatpush1.msra.mxu0 0.0
    %462 = vmatprep.subr.mxu0 0.0
    %463 = vmatpush1.msra.mxu0 0.0
    %464 = vmatprep.subr.mxu0 0.0
    %465 = vmatpush1.msra.mxu0 0.0
    %466 = vmatprep.subr.mxu0 0.0
    %467 = vmatpush1.msra.mxu0 0.0
    %468 = vmatprep.subr.mxu0 0.0
    %469 = vmatpush1.msra.mxu0 0.0
    %470 = vmatprep.subr.mxu0 0.0
    %471 = vmatpush1.msra.mxu0 0.0
    %472 = vmatprep.subr.mxu0 0.0
    %473 = vmatpush1.msra.mxu0 0.0
    %474 = vmatprep.subr.mxu0 0.0
    %475 = vmatpush1.msra.mxu0 0.0
    %476 = vmatprep.subr.mxu0 0.0
    %477 = vmatpush1.msra.mxu0 0.0
    %478 = vmatprep.subr.mxu0 0.0
    %479 = vmatpush1.msra.mxu0 0.0
    %480 = vmatprep.subr.mxu0 0.0
    %481 = vmatpush1.msra.mxu0 0.0
    %482 = vmatprep.subr.mxu0 0.0
    %483 = vmatpush1.msra.mxu0 0.0
    %484 = vmatprep.subr.mxu0 0.0
    %485 = vmatpush1.msra.mxu0 0.0
    %486 = vmatprep.subr.mxu0 0.0
    %487 = vmatpush1.msra.mxu0 0.0
    %488 = vmatprep.subr.mxu0 0.0
    %489 = vmatpush1.msra.mxu0 0.0
    %490 = vmatprep.subr.mxu0 0.0
    %491 = vmatpush1.msra.mxu0 0.0
    %492 = vmatprep.subr.mxu0 0.0
    %493 = vmatpush1.msra.mxu0 0.0
    %494 = vmatprep.subr.mxu0 0.0
    %495 = vmatpush1.msra.mxu0 0.0
    %496 = vmatprep.subr.mxu0 0.0
    %497 = vmatpush1.msra.mxu0 0.0
    %498 = vmatprep.subr.mxu0 0.0
    %499 = vmatpush1.msra.mxu0 0.0
    %500 = vmatprep.subr.mxu0 0.0
    %501 = vmatpush1.msra.mxu0 0.0
    %502 = vmatprep.subr.mxu0 0.0
    %503 = vmatpush1.msra.mxu0 0.0
    %504 = vmatprep.subr.mxu0 0.0
    %505 = vmatpush1.msra.mxu0 0.0
    %506 = vmatprep.subr.mxu0 0.0
    %507 = vmatpush1.msra.mxu0 0.0
    %508 = vmatprep.subr.mxu0 0.0
    %509 = vmatpush1.msra.mxu0 0.0
    %510 = vmatprep.subr.mxu0 0.0
    %511 = vmatpush1.msra.mxu0 0.0
    %512 = vmatprep.subr.mxu0 0.0
    %513 = vmatpush1.msra.mxu0 0.0
    %514 = vmatprep.subr.mxu0 0.0
    %515 = vmatpush1.msra.mxu0 0.0
    %516 = vmatprep.mubr.f32.mxu0 0.0
    %517 = vmatmul.mubr.f32.gmra.mrb[0].mxu0 %v447
    %v518 = vpop.f32.mrb[0].mxu0
    %v519 = vadd.f32 0.0, %v518
    %v520 = vpop.f32.mrb[0].mxu0
    %521 = vmatprep.mubr.f32.mxu0 0.0
    %522 = vmatmul.mubr.f32.gmra.mrb[0].mxu0 %v450
    %v523 = vpop.f32.mrb[0].mxu0
    %v524 = vadd.f32 0.0, %v523
    %v525 = vpop.f32.mrb[0].mxu0
    %526 = vdwg.mxu0
    %v527 = vmul.f32 %v165, %v519
    %v528 = vmul.f32 %v166, %v524
    %529 = vmatprep.subr.mxu0 0.0
    %530 = vmatpush1.msra.mxu0 %v527
    %531 = vmatprep.subr.mxu0 0.0
    %532 = vmatpush1.msra.mxu0 %v528
    %533 = vmatprep.subr.mxu0 0.0
    %534 = vmatpush1.msra.mxu0 0.0
    %535 = vmatprep.subr.mxu0 0.0
    %536 = vmatpush1.msra.mxu0 0.0
    %537 = vmatprep.subr.mxu0 0.0
    %538 = vmatpush1.msra.mxu0 0.0
    %539 = vmatprep.subr.mxu0 0.0
    %540 = vmatpush1.msra.mxu0 0.0
    %541 = vmatprep.subr.mxu0 0.0
    %542 = vmatpush1.msra.mxu0 0.0
    %543 = vmatprep.subr.mxu0 0.0
    %544 = vmatpush1.msra.mxu0 0.0
    %545 = vmatprep.subr.mxu0 0.0
    %546 = vmatpush1.msra.mxu0 0.0
    %547 = vmatprep.subr.mxu0 0.0
    %548 = vmatpush1.msra.mxu0 0.0
    %549 = vmatprep.subr.mxu0 0.0
    %550 = vmatpush1.msra.mxu0 0.0
    %551 = vmatprep.subr.mxu0 0.0
    %552 = vmatpush1.msra.mxu0 0.0
    %553 = vmatprep.subr.mxu0 0.0
    %554 = vmatpush1.msra.mxu0 0.0
    %555 = vmatprep.subr.mxu0 0.0
    %556 = vmatpush1.msra.mxu0 0.0
    %557 = vmatprep.subr.mxu0 0.0
    %558 = vmatpush1.msra.mxu0 0.0
    %559 = vmatprep.subr.mxu0 0.0
    %560 = vmatpush1.msra.mxu0 0.0
    %561 = vmatprep.subr.mxu0 0.0
    %562 = vmatpush1.msra.mxu0 0.0
    %563 = vmatprep.subr.mxu0 0.0
    %564 = vmatpush1.msra.mxu0 0.0
    %565 = vmatprep.subr.mxu0 0.0
    %566 = vmatpush1.msra.mxu0 0.0
    %567 = vmatprep.subr.mxu0 0.0
    %568 = vmatpush1.msra.mxu0 0.0
    %569 = vmatprep.subr.mxu0 0.0
    %570 = vmatpush1.msra.mxu0 0.0
    %571 = vmatprep.subr.mxu0 0.0
    %572 = vmatpush1.msra.mxu0 0.0
    %573 = vmatprep.subr.mxu0 0.0
    %574 = vmatpush1.msra.mxu0 0.0
    %575 = vmatprep.subr.mxu0 0.0
    %576 = vmatpush1.msra.mxu0 0.0
    %577 = vmatprep.subr.mxu0 0.0
    %578 = vmatpush1.msra.mxu0 0.0
    %579 = vmatprep.subr.mxu0 0.0
    %580 = vmatpush1.msra.mxu0 0.0
    %581 = vmatprep.subr.mxu0 0.0
    %582 = vmatpush1.msra.mxu0 0.0
    %583 = vmatprep.subr.mxu0 0.0
    %584 = vmatpush1.msra.mxu0 0.0
    %585 = vmatprep.subr.mxu0 0.0
    %586 = vmatpush1.msra.mxu0 0.0
    %587 = vmatprep.subr.mxu0 0.0
    %588 = vmatpush1.msra.mxu0 0.0
    %589 = vmatprep.subr.mxu0 0.0
    %590 = vmatpush1.msra.mxu0 0.0
    %591 = vmatprep.subr.mxu0 0.0
    %592 = vmatpush1.msra.mxu0 0.0
    %593 = vmatprep.mubr.f32.mxu0 0.0
    %594 = vmatmul.mubr.f32.gmra.mrb[0].mxu0 %v349
    %v595 = vpop.f32.mrb[0].mxu0
    %v596 = vadd.f32 %v527, %v595
    %v597 = vpop.f32.mrb[0].mxu0
    %598 = vmatprep.mubr.f32.mxu0 0.0
    %599 = vmatmul.mubr.f32.gmra.mrb[0].mxu0 %v352
    %v600 = vpop.f32.mrb[0].mxu0
    %v601 = vadd.f32 %v528, %v600
    %v602 = vpop.f32.mrb[0].mxu0
    %603 = vdwg.mxu0
    %v604 = vmul.f32 %v165, %v596
    %v605 = vmul.f32 %v166, %v601
    %v606 = vld [vmem:[%s7] sm:$0x1]
    %v608 = vlaneseq
    %v609 = vshrl.u32 %v608, 7
    %v610 = vsub.s32 0, %v609
    %v611 = vrot.slane %v606, %v610
    %v613 = vadd.f32 %v604, %v611
    %v614 = vadd.f32 %v605, %v611
    %615 = vxpose.xlu0.b32.start [1/16] %v55, 128
    %616 = vxpose.xlu0.b32.cont [2/16] %v56, 128
    %617 = vxpose.xlu0.b32.cont [3/16] 0.0, 128
    %618 = vxpose.xlu0.b32.cont [4/16] 0.0, 128
    %619 = vxpose.xlu0.b32.cont [5/16] 0.0, 128
    %620 = vxpose.xlu0.b32.cont [6/16] 0.0, 128
    %621 = vxpose.xlu0.b32.cont [7/16] 0.0, 128
    %622 = vxpose.xlu0.b32.cont [8/16] 0.0, 128
    %623 = vxpose.xlu0.b32.cont [9/16] 0.0, 128
    %624 = vxpose.xlu0.b32.cont [10/16] 0.0, 128
    %625 = vxpose.xlu0.b32.cont [11/16] 0.0, 128
    %626 = vxpose.xlu0.b32.cont [12/16] 0.0, 128
    %627 = vxpose.xlu0.b32.cont [13/16] 0.0, 128
    %628 = vxpose.xlu0.b32.cont [14/16] 0.0, 128
    %629 = vxpose.xlu0.b32.cont [15/16] 0.0, 128
    %630 = vxpose.xlu0.b32.end [16/16] 0.0, 128
    %v631 = vpop.trf.xlu0
    %v632 = vpop.trf.xlu0
    %v633 = vpop.trf.xlu0
    %v634 = vpop.trf.xlu0
    %v635 = vpop.trf.xlu0
    %v636 = vpop.trf.xlu0
    %v637 = vpop.trf.xlu0
    %v638 = vpop.trf.xlu0
    %v639 = vpop.trf.xlu0
    %v640 = vpop.trf.xlu0
    %v641 = vpop.trf.xlu0
    %v642 = vpop.trf.xlu0
    %v643 = vpop.trf.xlu0
    %v644 = vpop.trf.xlu0
    %v645 = vpop.trf.xlu0
    %v646 = vpop.trf.xlu0
    %v648 = vsel %vm156, %v631, 0
    %v651 = vsel %vm156, %v632, 0
    %v654 = vsel %vm156, %v633, 0
    %v657 = vsel %vm156, %v634, 0
    %659 = vmatprep.subr.mxu0 0.0
    %660 = vmatpush1.msra.mxu0 %v613
    %661 = vmatprep.subr.mxu0 0.0
    %662 = vmatpush1.msra.mxu0 %v614
    %663 = vmatprep.subr.mxu0 0.0
    %664 = vmatpush1.msra.mxu0 0.0
    %665 = vmatprep.subr.mxu0 0.0
    %666 = vmatpush1.msra.mxu0 0.0
    %667 = vmatprep.subr.mxu0 0.0
    %668 = vmatpush1.msra.mxu0 0.0
    %669 = vmatprep.subr.mxu0 0.0
    %670 = vmatpush1.msra.mxu0 0.0
    %671 = vmatprep.subr.mxu0 0.0
    %672 = vmatpush1.msra.mxu0 0.0
    %673 = vmatprep.subr.mxu0 0.0
    %674 = vmatpush1.msra.mxu0 0.0
    %675 = vmatprep.subr.mxu0 0.0
    %676 = vmatpush1.msra.mxu0 0.0
    %677 = vmatprep.subr.mxu0 0.0
    %678 = vmatpush1.msra.mxu0 0.0
    %679 = vmatprep.subr.mxu0 0.0
    %680 = vmatpush1.msra.mxu0 0.0
    %681 = vmatprep.subr.mxu0 0.0
    %682 = vmatpush1.msra.mxu0 0.0
    %683 = vmatprep.subr.mxu0 0.0
    %684 = vmatpush1.msra.mxu0 0.0
    %685 = vmatprep.subr.mxu0 0.0
    %686 = vmatpush1.msra.mxu0 0.0
    %687 = vmatprep.subr.mxu0 0.0
    %688 = vmatpush1.msra.mxu0 0.0
    %689 = vmatprep.subr.mxu0 0.0
    %690 = vmatpush1.msra.mxu0 0.0
    %691 = vmatprep.subr.mxu0 0.0
    %692 = vmatpush1.msra.mxu0 0.0
    %693 = vmatprep.subr.mxu0 0.0
    %694 = vmatpush1.msra.mxu0 0.0
    %695 = vmatprep.subr.mxu0 0.0
    %696 = vmatpush1.msra.mxu0 0.0
    %697 = vmatprep.subr.mxu0 0.0
    %698 = vmatpush1.msra.mxu0 0.0
    %699 = vmatprep.subr.mxu0 0.0
    %700 = vmatpush1.msra.mxu0 0.0
    %701 = vmatprep.subr.mxu0 0.0
    %702 = vmatpush1.msra.mxu0 0.0
    %703 = vmatprep.subr.mxu0 0.0
    %704 = vmatpush1.msra.mxu0 0.0
    %705 = vmatprep.subr.mxu0 0.0
    %706 = vmatpush1.msra.mxu0 0.0
    %707 = vmatprep.subr.mxu0 0.0
    %708 = vmatpush1.msra.mxu0 0.0
    %709 = vmatprep.subr.mxu0 0.0
    %710 = vmatpush1.msra.mxu0 0.0
    %711 = vmatprep.subr.mxu0 0.0
    %712 = vmatpush1.msra.mxu0 0.0
    %713 = vmatprep.subr.mxu0 0.0
    %714 = vmatpush1.msra.mxu0 0.0
    %715 = vmatprep.subr.mxu0 0.0
    %716 = vmatpush1.msra.mxu0 0.0
    %717 = vmatprep.subr.mxu0 0.0
    %718 = vmatpush1.msra.mxu0 0.0
    %719 = vmatprep.subr.mxu0 0.0
    %720 = vmatpush1.msra.mxu0 0.0
    %721 = vmatprep.subr.mxu0 0.0
    %722 = vmatpush1.msra.mxu0 0.0
    %723 = vmatprep.mubr.f32.mxu0 0.0
    %724 = vmatmul.mubr.f32.gmra.mrb[0].mxu0 %v648
    %v725 = vpop.f32.mrb[0].mxu0
    %v726 = vadd.f32 0.0, %v725
    %v727 = vpop.f32.mrb[0].mxu0
    %728 = vmatprep.mubr.f32.mxu0 0.0
    %729 = vmatmul.mubr.f32.gmra.mrb[0].mxu0 %v651
    %v730 = vpop.f32.mrb[0].mxu0
    %v731 = vadd.f32 0.0, %v730
    %v732 = vpop.f32.mrb[0].mxu0
    %733 = vmatprep.mubr.f32.mxu0 0.0
    %734 = vmatmul.mubr.f32.gmra.mrb[0].mxu0 %v654
    %v735 = vpop.f32.mrb[0].mxu0
    %v736 = vadd.f32 0.0, %v735
    %v737 = vpop.f32.mrb[0].mxu0
    %738 = vmatprep.mubr.f32.mxu0 0.0
    %739 = vmatmul.mubr.f32.gmra.mrb[0].mxu0 %v657
    %v740 = vpop.f32.mrb[0].mxu0
    %v741 = vadd.f32 0.0, %v740
    %v742 = vpop.f32.mrb[0].mxu0
    %743 = vdwg.mxu0
    %v744 = vmul.f32 %v726, %v726
    %v745 = vmul.f32 %v731, %v731
    %v746 = vmul.f32 %v736, %v736
    %v747 = vmul.f32 %v741, %v741
    %v748 = vsel %vm68, %v744, 0.0
    %749 = vadd.xlane.f32.xlu0 %v748
    %v750 = vpop.xlane.xlu0 %749
    %v751 = vsel %vm68, %v745, 0.0
    %752 = vadd.xlane.f32.xlu0 %v751
    %v753 = vpop.xlane.xlu0 %752
    %v754 = vsel %vm68, %v746, 0.0
    %755 = vadd.xlane.f32.xlu0 %v754
    %v756 = vpop.xlane.xlu0 %755
    %v757 = vsel %vm68, %v747, 0.0
    %758 = vadd.xlane.f32.xlu0 %v757
    %v759 = vpop.xlane.xlu0 %758
    %v760 = vmax.f32 %v750, 1e-24
    %v761 = vmax.f32 %v753, 1e-24
    %v762 = vmax.f32 %v756, 1e-24
    %v763 = vmax.f32 %v759, 1e-24
    %v764 = vrsqrt.pop %v760
    %v765 = vrsqrt.pop %v761
    %v766 = vrsqrt.pop %v762
    %v767 = vrsqrt.pop %v763
    %v768 = vmul.f32 %v726, %v764
    %v769 = vmul.f32 %v731, %v765
    %v770 = vmul.f32 %v736, %v766
    %v771 = vmul.f32 %v741, %v767
    %v772 = vmul.f32 %v768, %v770
    %v773 = vmul.f32 %v769, %v771
    %v774 = vld [vmem:[%s8] sm:$0xff]
    %v775 = vld [vmem:[%s8 + $0x8] sm:$0xff]
    %v776 = vld [vmem:[%s8 + $0x10] sm:$0xff]
    %v777 = vld [vmem:[%s8 + $0x18] sm:$0xff]
    %v778 = vld [vmem:[%s9] sm:$0x1]
    %v780 = vlaneseq
    %v781 = vshrl.u32 %v780, 7
    %v782 = vsub.s32 0, %v781
    %v783 = vrot.slane %v778, %v782
    %v786 = vsel %vm68, %v772, 0
    %v789 = vsel %vm68, %v773, 0
    %791 = vmatprep.subr.mxu0 0.0
    %792 = vmatpush1.msra.mxu0 %v774
    %793 = vmatprep.subr.mxu0 0.0
    %794 = vmatpush1.msra.mxu0 %v775
    %795 = vmatprep.subr.mxu0 0.0
    %796 = vmatpush1.msra.mxu0 %v776
    %797 = vmatprep.subr.mxu0 0.0
    %798 = vmatpush1.msra.mxu0 %v777
    %799 = vmatprep.subr.mxu0 0.0
    %800 = vmatpush1.msra.mxu0 0.0
    %801 = vmatprep.subr.mxu0 0.0
    %802 = vmatpush1.msra.mxu0 0.0
    %803 = vmatprep.subr.mxu0 0.0
    %804 = vmatpush1.msra.mxu0 0.0
    %805 = vmatprep.subr.mxu0 0.0
    %806 = vmatpush1.msra.mxu0 0.0
    %807 = vmatprep.subr.mxu0 0.0
    %808 = vmatpush1.msra.mxu0 0.0
    %809 = vmatprep.subr.mxu0 0.0
    %810 = vmatpush1.msra.mxu0 0.0
    %811 = vmatprep.subr.mxu0 0.0
    %812 = vmatpush1.msra.mxu0 0.0
    %813 = vmatprep.subr.mxu0 0.0
    %814 = vmatpush1.msra.mxu0 0.0
    %815 = vmatprep.subr.mxu0 0.0
    %816 = vmatpush1.msra.mxu0 0.0
    %817 = vmatprep.subr.mxu0 0.0
    %818 = vmatpush1.msra.mxu0 0.0
    %819 = vmatprep.subr.mxu0 0.0
    %820 = vmatpush1.msra.mxu0 0.0
    %821 = vmatprep.subr.mxu0 0.0
    %822 = vmatpush1.msra.mxu0 0.0
    %823 = vmatprep.subr.mxu0 0.0
    %824 = vmatpush1.msra.mxu0 0.0
    %825 = vmatprep.subr.mxu0 0.0
    %826 = vmatpush1.msra.mxu0 0.0
    %827 = vmatprep.subr.mxu0 0.0
    %828 = vmatpush1.msra.mxu0 0.0
    %829 = vmatprep.subr.mxu0 0.0
    %830 = vmatpush1.msra.mxu0 0.0
    %831 = vmatprep.subr.mxu0 0.0
    %832 = vmatpush1.msra.mxu0 0.0
    %833 = vmatprep.subr.mxu0 0.0
    %834 = vmatpush1.msra.mxu0 0.0
    %835 = vmatprep.subr.mxu0 0.0
    %836 = vmatpush1.msra.mxu0 0.0
    %837 = vmatprep.subr.mxu0 0.0
    %838 = vmatpush1.msra.mxu0 0.0
    %839 = vmatprep.subr.mxu0 0.0
    %840 = vmatpush1.msra.mxu0 0.0
    %841 = vmatprep.subr.mxu0 0.0
    %842 = vmatpush1.msra.mxu0 0.0
    %843 = vmatprep.subr.mxu0 0.0
    %844 = vmatpush1.msra.mxu0 0.0
    %845 = vmatprep.subr.mxu0 0.0
    %846 = vmatpush1.msra.mxu0 0.0
    %847 = vmatprep.subr.mxu0 0.0
    %848 = vmatpush1.msra.mxu0 0.0
    %849 = vmatprep.subr.mxu0 0.0
    %850 = vmatpush1.msra.mxu0 0.0
    %851 = vmatprep.subr.mxu0 0.0
    %852 = vmatpush1.msra.mxu0 0.0
    %853 = vmatprep.subr.mxu0 0.0
    %854 = vmatpush1.msra.mxu0 0.0
    %855 = vmatprep.mubr.f32.mxu0 0.0
    %856 = vmatmul.mubr.f32.gmra.mrb[0].mxu0 %v786
    %v857 = vpop.f32.mrb[0].mxu0
    %v858 = vadd.f32 %v783, %v857
    %v859 = vpop.f32.mrb[0].mxu0
    %860 = vmatprep.mubr.f32.mxu0 0.0
    %861 = vmatmul.mubr.f32.gmra.mrb[0].mxu0 %v789
    %v862 = vpop.f32.mrb[0].mxu0
    %v863 = vadd.f32 %v783, %v862
    %v864 = vpop.f32.mrb[0].mxu0
    %865 = vdwg.mxu0
    %v866 = vmax.f32 %v858, 0.0
    %v867 = vmax.f32 %v863, 0.0
    %v868 = vld [vmem:[%s10] sm:$0x1]
    %s869 = sld [smem:[#allocation2]]
    %v870 = vstv %s869
    %v872 = vsel %vm68, %v868, 0
    %v875 = vsel %vm68, %v866, 0
    %v878 = vsel %vm68, %v867, 0
    %880 = vmatprep.subr.mxu0 0.0
    %881 = vmatpush1.xpose.msra.mxu0 %v875
    %882 = vmatprep.subr.mxu0 0.0
    %883 = vmatpush1.xpose.msra.mxu0 %v878
    %884 = vmatprep.subr.mxu0 0.0
    %885 = vmatpush1.xpose.msra.mxu0 0.0
    %886 = vmatprep.subr.mxu0 0.0
    %887 = vmatpush1.xpose.msra.mxu0 0.0
    %888 = vmatprep.subr.mxu0 0.0
    %889 = vmatpush1.xpose.msra.mxu0 0.0
    %890 = vmatprep.subr.mxu0 0.0
    %891 = vmatpush1.xpose.msra.mxu0 0.0
    %892 = vmatprep.subr.mxu0 0.0
    %893 = vmatpush1.xpose.msra.mxu0 0.0
    %894 = vmatprep.subr.mxu0 0.0
    %895 = vmatpush1.xpose.msra.mxu0 0.0
    %896 = vmatprep.subr.mxu0 0.0
    %897 = vmatpush1.xpose.msra.mxu0 0.0
    %898 = vmatprep.subr.mxu0 0.0
    %899 = vmatpush1.xpose.msra.mxu0 0.0
    %900 = vmatprep.subr.mxu0 0.0
    %901 = vmatpush1.xpose.msra.mxu0 0.0
    %902 = vmatprep.subr.mxu0 0.0
    %903 = vmatpush1.xpose.msra.mxu0 0.0
    %904 = vmatprep.subr.mxu0 0.0
    %905 = vmatpush1.xpose.msra.mxu0 0.0
    %906 = vmatprep.subr.mxu0 0.0
    %907 = vmatpush1.xpose.msra.mxu0 0.0
    %908 = vmatprep.subr.mxu0 0.0
    %909 = vmatpush1.xpose.msra.mxu0 0.0
    %910 = vmatprep.subr.mxu0 0.0
    %911 = vmatpush1.xpose.msra.mxu0 0.0
    %912 = vmatprep.subr.mxu0 0.0
    %913 = vmatpush1.xpose.msra.mxu0 0.0
    %914 = vmatprep.subr.mxu0 0.0
    %915 = vmatpush1.xpose.msra.mxu0 0.0
    %916 = vmatprep.subr.mxu0 0.0
    %917 = vmatpush1.xpose.msra.mxu0 0.0
    %918 = vmatprep.subr.mxu0 0.0
    %919 = vmatpush1.xpose.msra.mxu0 0.0
    %920 = vmatprep.subr.mxu0 0.0
    %921 = vmatpush1.xpose.msra.mxu0 0.0
    %922 = vmatprep.subr.mxu0 0.0
    %923 = vmatpush1.xpose.msra.mxu0 0.0
    %924 = vmatprep.subr.mxu0 0.0
    %925 = vmatpush1.xpose.msra.mxu0 0.0
    %926 = vmatprep.subr.mxu0 0.0
    %927 = vmatpush1.xpose.msra.mxu0 0.0
    %928 = vmatprep.subr.mxu0 0.0
    %929 = vmatpush1.xpose.msra.mxu0 0.0
    %930 = vmatprep.subr.mxu0 0.0
    %931 = vmatpush1.xpose.msra.mxu0 0.0
    %932 = vmatprep.subr.mxu0 0.0
    %933 = vmatpush1.xpose.msra.mxu0 0.0
    %934 = vmatprep.subr.mxu0 0.0
    %935 = vmatpush1.xpose.msra.mxu0 0.0
    %936 = vmatprep.subr.mxu0 0.0
    %937 = vmatpush1.xpose.msra.mxu0 0.0
    %938 = vmatprep.subr.mxu0 0.0
    %939 = vmatpush1.xpose.msra.mxu0 0.0
    %940 = vmatprep.subr.mxu0 0.0
    %941 = vmatpush1.xpose.msra.mxu0 0.0
    %942 = vmatprep.subr.mxu0 0.0
    %943 = vmatpush1.xpose.msra.mxu0 0.0
    %944 = vmatprep.mubr.f32.mxu0 0.0
    %945 = vmatmul.mubr.f32.gmra.mrb[0].mxu0 %v872
    %v946 = vpop.f32.mrb[0].mxu0
    %v947 = vadd.f32 %v870, %v946
    %v948 = vpop.f32.mrb[0].mxu0
    %949 = vdwg.mxu0
    %vm950 = vcmask 122880
    %951 = vst.msk [vmem:[#allocation3] sm:$0x1] %vm950, %v947
    // Predicated region
    $region50: #{experiment_1_forward.1} parent=1 // pred_check
      _
    $region51: #{experiment_1_forward.1} parent=1 // pred_check_branch
      %953 = sbr.rel (0) target = $region53
    $region52: #{experiment_1_forward.1} parent=1 // pred_region
      %s955 = ssub.s32 16, 16
      %956 = vsyncadd [#allocation4], %s955
      %s958 = sshll.u32 [#allocation3], 4
      %s959 = int_to_ptr.vmem [resolvable:$true] %s958
      %961 = dma.vmem_to_hbm [thread:$0]  %s959, 16, %s12, [#allocation4]
    $region53: #{experiment_1_forward.1} parent=1 // pred_fallthru
      _
    // Predicated region
    $region54: #{experiment_1_forward.1} parent=1 // pred_check
      _
    $region55: #{experiment_1_forward.1} parent=1 // pred_check_branch
      %963 = sbr.rel (0) target = $region57
    $region56: #{experiment_1_forward.1} parent=1 // pred_region
      %964 = dma.done [#allocation4], 16
    $region57: #{experiment_1_forward.1} parent=1 // pred_fallthru
      _
    %965 = vsyncpa [#allocation4], 1

</llo_original>
